<compile_context>
chip_gen: v7x
topology: tpu7x:2x2x1
jax: 0.10.0
libtpu: 0.0.40
codegen_flags: <defaults>
</compile_context>

<pallas_src>
import functools

import jax
import jax.numpy as jnp
from jax.experimental import pallas as pl
from jax.experimental.pallas import tpu as pltpu


# ----------------------------------------------------------------------------
# helpers
# ----------------------------------------------------------------------------
def _round_up(x, m):
    return (x + m - 1) // m * m


def _conv_geometry(H, W):
    guard = W + 3                       # |min tap offset| = (W+2)+1
    s2 = (H + 2) * (W + 2)              # one zero-padded plane, flattened
    s2pad = _round_up(s2, 128)          # lane-dense output width
    s2gpad = _round_up(2 * guard + s2pad, 128)
    return guard, s2, s2pad, s2gpad


# ----------------------------------------------------------------------------
# Fused conv3d Pallas kernel (in-VMEM patch construction + MXU matmul +
# bias / PReLU / tanh / ConvLSTM-gate epilogue).
# ----------------------------------------------------------------------------
def _conv_kernel(*refs, wdim, guard, s2pad, has_bias, act, alpha, din):
    x_ref, w_ref = refs[0], refs[1]
    pos = 2
    b_ref = None
    if has_bias:
        b_ref = refs[pos]
        pos += 1
    if act == 'lstm':
        c_ref = refs[pos]
        h_ref = refs[pos + 1]
        c_out_ref = refs[pos + 2]
    else:
        o_ref = refs[pos]

    d = pl.program_id(1)                # output plane (original seq index)

    acc = None
    for kd in range(3):                 # tap along seq: dynamic major index
        taps = []
        for kh in range(3):
            for kw in range(3):
                # static lane offset of this tap inside the framed plane
                off = guard + (kh - 1) * (wdim + 2) + (kw - 1)
                taps.append(x_ref[d + kd, :, off:off + s2pad])
        pat = jnp.concatenate(taps, axis=0)          # (9*Cinp, S2PAD) bf16
        part = jnp.dot(w_ref[kd], pat,
                       preferred_element_type=jnp.float32)
        acc = part if acc is None else acc + part     # (Mp, S2PAD) f32

    if has_bias:
        acc = acc + b_ref[...]                        # (Mp, 1) lane-broadcast
    if act == 'prelu':
        acc = jnp.where(acc >= 0.0, acc, acc * alpha)
    elif act == 'tanh':
        acc = jnp.tanh(acc)

    if act == 'lstm':
        # rows [0:4*din] of the fused gate conv are i | f | g | o
        i = jax.nn.sigmoid(acc[0 * din:1 * din])
        f = jax.nn.sigmoid(acc[1 * din:2 * din])
        g = jnp.tanh(acc[2 * din:3 * din])
        o = jax.nn.sigmoid(acc[3 * din:4 * din])
        c_new = f * c_ref[...] + i * g
        h_ref[...] = (o * jnp.tanh(c_new)).astype(h_ref.dtype)
        c_out_ref[...] = c_new.astype(c_out_ref.dtype)
    else:
        o_ref[...] = acc.astype(o_ref.dtype)


@functools.lru_cache(maxsize=None)
def _build_conv_call(n, d_planes, cinp, mp, wdim, s2pad, s2gpad, guard,
                     has_bias, act, alpha, out_dtype_name, din):
    dp2 = d_planes + 2
    kernel = functools.partial(_conv_kernel, wdim=wdim, guard=guard,
                               s2pad=s2pad, has_bias=has_bias, act=act,
                               alpha=alpha, din=din)

    in_specs = [
        # framed activation: whole sample, re-DMA'd only when n changes
        pl.BlockSpec((None, dp2, cinp, s2gpad), lambda i, j: (i, 0, 0, 0)),
        # packed weights: resident
        pl.BlockSpec((3, mp, 9 * cinp), lambda i, j: (0, 0, 0)),
    ]
    if has_bias:
        in_specs.append(pl.BlockSpec((mp, 1), lambda i, j: (0, 0)))
    if act == 'lstm':
        in_specs.append(
            pl.BlockSpec((None, None, din, s2pad), lambda i, j: (i, j, 0, 0)))
        hc_spec = pl.BlockSpec((None, None, din, s2pad),
                               lambda i, j: (i, j, 0, 0))
        out_specs = [hc_spec, hc_spec]
        out_shape = (
            jax.ShapeDtypeStruct((n, d_planes, din, s2pad), jnp.float32),
            jax.ShapeDtypeStruct((n, d_planes, din, s2pad), jnp.float32),
        )
    else:
        out_specs = pl.BlockSpec((None, None, mp, s2pad),
                                 lambda i, j: (i, j, 0, 0))
        out_shape = jax.ShapeDtypeStruct((n, d_planes, mp, s2pad),
                                         jnp.dtype(out_dtype_name))

    call = pl.pallas_call(
        kernel,
        out_shape=out_shape,
        grid_spec=pltpu.PrefetchScalarGridSpec(
            num_scalar_prefetch=0,
            grid=(n, d_planes),
            in_specs=in_specs,
            out_specs=out_specs),
        compiler_params=pltpu.CompilerParams(
            dimension_semantics=("parallel", "parallel")),
    )
    return jax.jit(call)


# ----------------------------------------------------------------------------
# framing helpers (one copy in, one copy out - replaces the 27x HBM im2col)
# ----------------------------------------------------------------------------
def _frame_input(x, cinp, guard, s2gpad):
    """(N, Cin, D, H, W) -> (N, D+2, Cinp, S2Gpad) bf16 zero-padded frame."""
    N, Cin, D, H, W = x.shape
    s2 = (H + 2) * (W + 2)
    xb = x.astype(jnp.bfloat16)
    xb = jnp.pad(xb, ((0, 0), (0, cinp - Cin), (1, 1), (1, 1), (1, 1)))
    xb = xb.transpose(0, 2, 1, 3, 4).reshape(N, D + 2, cinp, s2)
    return jnp.pad(xb, ((0, 0), (0, 0), (0, 0), (guard, s2gpad - guard - s2)))


def _frame_state(t, s2pad):
    """(N, C, D, H, W) -> (N, D, C, S2PAD): values at padded-plane positions."""
    N, C, D, H, W = t.shape
    s2 = (H + 2) * (W + 2)
    tt = jnp.pad(t.astype(jnp.float32),
                 ((0, 0), (0, 0), (0, 0), (1, 1), (1, 1)))
    tt = tt.transpose(0, 2, 1, 3, 4).reshape(N, D, C, s2)
    return jnp.pad(tt, ((0, 0), (0, 0), (0, 0), (0, s2pad - s2)))


def _unframe(o, cout, D, H, W):
    """(N, D, Mp, S2PAD) -> (N, Cout, D, H, W) (drop pad ring / lanes)."""
    N = o.shape[0]
    s2 = (H + 2) * (W + 2)
    o = o[:, :, :cout, :s2].reshape(N, D, cout, H + 2, W + 2)
    o = o[:, :, :, 1:H + 1, 1:W + 1]
    return o.transpose(0, 2, 1, 3, 4)


# ----------------------------------------------------------------------------
# conv3d / ConvLSTM wrappers
# ----------------------------------------------------------------------------
def conv3d(x, cp, act=None, alpha=None, out_dtype=jnp.float32):
    """3x3x3 / stride 1 / pad 1 Conv3d with fused bias + PReLU/tanh epilogue."""
    N, Cin, D, H, W = x.shape
    assert Cin == cp['cin'], (Cin, cp['cin'])
    guard, _, s2pad, s2gpad = _conv_geometry(H, W)
    xf = _frame_input(x, cp['cinp'], guard, s2gpad)
    args = [xf, cp['w']]
    has_bias = cp['b'] is not None
    if has_bias:
        args.append(cp['b'])
    # alpha is baked in as a compile-time scalar (params are concrete here)
    a = float(alpha) if alpha is not None else 0.0
    call = _build_conv_call(N, D, cp['cinp'], cp['mp'], W, s2pad, s2gpad,
                            guard, has_bias, act or 'none', a,
                            jnp.dtype(out_dtype).name, 0)
    out = call(*args)
    return _unframe(out, cp['cout'], D, H, W)


def convlstm_forward(p, x, h, c):
    """One fused kernel: 4-gate conv + sigmoid/tanh gating + cell update."""
    din = c.shape[1]
    xh = jnp.concatenate([x, h], axis=1)
    N, Cin, D, H, W = xh.shape
    assert Cin == p['cin']
    guard, _, s2pad, s2gpad = _conv_geometry(H, W)
    xf = _frame_input(xh, p['cinp'], guard, s2gpad)
    cf = _frame_state(c, s2pad)
    call = _build_conv_call(N, D, p['cinp'], p['mp'], W, s2pad, s2gpad,
                            guard, True, 'lstm', 0.0, 'float32', din)
    hf, cf_new = call(xf, p['w'], p['b'], cf)
    return _unframe(hf, din, D, H, W), _unframe(cf_new, din, D, H, W)


# ----------------------------------------------------------------------------
# XLA glue ops (BN, PReLU, pooling, patch bookkeeping) - elementwise chains
# are left to XLA fusion (cheaper than the old pad/reshape Pallas plumbing).
# ----------------------------------------------------------------------------
def prelu(x, a):
    return jnp.where(x >= 0, x, a * x)


def bn_prelu(x, bn, a, eps=1e-5):
    # train-mode BatchNorm3d forward: batch statistics, biased variance (f32)
    x = x.astype(jnp.float32)
    mean = x.mean(axis=(0, 2, 3, 4), keepdims=True)
    var = x.var(axis=(0, 2, 3, 4), keepdims=True)
    y = (x - mean) * jax.lax.rsqrt(var + eps)
    y = bn['g'].reshape(1, -1, 1, 1, 1) * y + bn['b'].reshape(1, -1, 1, 1, 1)
    return jnp.where(y >= 0, y, a * y)


def maxpool_122(x):
    """MaxPool3d((1,2,2), (1,2,2)) with window-argmax indices."""
    N, C, D, H, W = x.shape
    xr = x.reshape(N, C, D, H // 2, 2, W // 2, 2)
    win = xr.transpose(0, 1, 2, 3, 5, 4, 6).reshape(N, C, D, H // 2, W // 2, 4)
    idx = jnp.argmax(win, axis=-1)
    val = jnp.max(win, axis=-1)
    return val, idx


def maxunpool_122(val, idx):
    """MaxUnpool3d((1,2,2), (1,2,2)); output size is (D, 2*Hp, 2*Wp)."""
    N, C, D, Hp, Wp = val.shape
    onehot = jax.nn.one_hot(idx, 4, dtype=val.dtype)
    out = val[..., None] * onehot
    out = out.reshape(N, C, D, Hp, Wp, 2, 2).transpose(0, 1, 2, 3, 5, 4, 6)
    return out.reshape(N, C, D, Hp * 2, Wp * 2)


def patch_divide(inp, pm):
    if inp is None:
        return None
    B, C, S, R, Co = inp.shape
    rows = R // pm[0]
    cols = Co // pm[1]
    Np = B * pm[0] * pm[1]
    p = inp.reshape(B, C, S, pm[0], rows, pm[1], cols)
    p = p.transpose(0, 3, 5, 1, 2, 4, 6)
    return p.reshape(Np, C, S, rows, cols)


def patch_merge(x, h, c, e, pm):
    N, _, S, rows, cols = x.shape
    row = rows * pm[0]
    col = cols * pm[1]
    B = N // pm[0] // pm[1]

    def m(t, s):
        t = t.reshape(B, pm[0], pm[1], -1, s, rows, cols)
        t = t.transpose(0, 3, 4, 1, 5, 2, 6)
        return t.reshape(B, -1, s, row, col)

    x = m(x, S)
    h = m(h, S)
    c = m(c, S)
    if e is not None:
        e = m(e, S + 1)
    return x, h, c, e


# ----------------------------------------------------------------------------
# Sub-modules
# ----------------------------------------------------------------------------
def self_atten_forward(p, e):
    B, Cc, S, R, Co = e.shape
    # fused q/k/v conv: one framed activation, one matmul, Cout = 4 + 4 + Cc
    qkv = conv3d(e, p['qkv'])
    L = S * R * Co
    q2 = qkv[:, 0:4].reshape(B, 4, L)
    k2 = qkv[:, 4:8].reshape(B, 4, L)
    v2 = qkv[:, 8:8 + Cc].reshape(B, Cc, L)
    # L is tiny after three (1,2,2) pools: keep the bmm / softmax in XLA.
    energy = jnp.einsum('bcl,bcm->blm', q2, k2)
    attn = jax.nn.softmax(energy, axis=-1)
    out = jnp.einsum('bcm,blm->bcl', v2, attn)
    out = out.reshape(B, Cc, S, R, Co)
    return p['gamma'] * out + e


def atten_forward(p, event):
    def cbr(x, conv_p, bn, a):
        # conv emits bf16 (halves its HBM writes); BN stats still in f32
        y = conv3d(x, conv_p, out_dtype=jnp.bfloat16)
        return bn_prelu(y, bn, a)

    e0 = cbr(event, p['ce_conv1'], p['ce_bn1'], p['ce_pr1'])
    e0 = cbr(e0, p['ce_conv2'], p['ce_bn2'], p['ce_pr2'])
    e1, ind1 = maxpool_122(e0)
    e2 = cbr(e1, p['down0_conv'], p['down0_bn'], p['down0_pr'])
    e3, ind3 = maxpool_122(e2)
    e4 = cbr(e3, p['down1_conv'], p['down1_bn'], p['down1_pr'])
    e5, ind5 = maxpool_122(e4)
    e5 = self_atten_forward(p['sa'], e5)
    e_save = e5
    eu1 = maxunpool_122(e5, ind5) + e4
    eu2 = cbr(eu1, p['up0_conv'], p['up0_bn'], p['up0_pr'])
    eu3 = maxunpool_122(eu2, ind3) + e2
    eu4 = cbr(eu3, p['up1_conv'], p['up1_bn'], p['up1_pr'])
    eu5 = maxunpool_122(eu4, ind1) + e0
    e_out = conv3d(eu5, p['out_conv'], act='tanh')       # bias + tanh fused
    return e_out, e_save


def resblock_forward(blocks, x):
    for blk in blocks:
        resx = x
        y = conv3d(x, blk['c1'], act='prelu', alpha=blk['p1'])
        y = conv3d(y, blk['c2'], act='prelu', alpha=blk['p2'])
        x = prelu(y + resx, blk['p_skip'])
    return x


# ----------------------------------------------------------------------------
# MPEVNet forward
# ----------------------------------------------------------------------------
def forward_patch(params, inp, event, iteration, patch_modes, level,
                  x, h, c, e, din):
    patch_mode = patch_modes[level]
    patches_input = patch_divide(inp, patch_mode)
    patches_event = patch_divide(event, patch_mode)
    B, _, S, R, C = patches_input.shape
    if x is None and iteration != 0:
        x = patches_input
    if h is None and iteration != 0:
        h = jnp.zeros((B, din, S, R, C), jnp.float32)
        c = jnp.zeros((B, din, S, R, C), jnp.float32)
    e_save = None
    for itr in range(iteration):
        xx = jnp.concatenate([patches_input, x], axis=1)
        xx = conv3d(xx, params['conv0'], act='prelu', alpha=params['conv0_pr'])
        e, e_save = atten_forward(params['atten'], patches_event)
        # event modulation: single XLA elementwise fusion
        xx = xx + xx * (e[:, :, :-1, :, :] + e[:, :, 1:, :, :])
        h, c = convlstm_forward(params['lstm'], xx, h, c)
        x = h
        if itr + 1 == iteration:
            next_mode = patch_modes[min(len(patch_modes) - 1, level + 1)]
            x, h, c, e = patch_merge(x, h, c, e, patch_mode)
            x = patch_divide(x, next_mode)
            h = patch_divide(h, next_mode)
            c = patch_divide(c, next_mode)
            e = patch_divide(e, next_mode)
            patches_input = patch_divide(inp, next_mode)
        x = resblock_forward(params['res'], x)
        x = conv3d(x, params['conv'])
        x = x + patches_input
    return x, h, c, e, e_save


def mpevnet_forward(params, inp, event, iterations=(2, 2, 2), din=8):
    patch_modes = [(2, 2), (1, 2), (1, 1)]
    x = h = c = e = None
    N, chn, S, R, Co = inp.shape
    if_pad_rows = (R % 2) != 0
    if if_pad_rows:
        inp = jnp.concatenate(
            [inp, jnp.zeros((N, chn, S, 1, Co), inp.dtype)], axis=3)
        event = jnp.concatenate(
            [event, jnp.zeros((N, chn - 1, S + 1, 1, Co), event.dtype)], axis=3)
        R += 1
    if_pad_cols = (Co % 2) != 0
    if if_pad_cols:
        inp = jnp.concatenate(
            [inp, jnp.zeros((N, chn, S, R, 1), inp.dtype)], axis=4)
        event = jnp.concatenate(
            [event, jnp.zeros((N, chn - 1, S + 1, R, 1), event.dtype)], axis=4)
        Co += 1
    for level, it in enumerate(iterations):
        x, h, c, e, _ = forward_patch(params, inp, event, it, patch_modes,
                                      level, x, h, c, e, din)
    if if_pad_rows:
        x = x[:, :, :, :-1, :]
    if if_pad_cols:
        x = x[:, :, :, :, :-1]
    return x


# ----------------------------------------------------------------------------
# Deterministic parameter initialization (shapes from MPEVNet.__init__).
# Weights are packed/padded for the kernel once, at init.
# ----------------------------------------------------------------------------
def init_params(key, din=8):
    keys = iter(jax.random.split(key, 200))

    def raw(cout, cin, bias=True):
        w = jax.random.normal(next(keys), (cout, cin, 3, 3, 3),
                              jnp.float32) * 0.05
        b = (jax.random.normal(next(keys), (cout,), jnp.float32) * 0.05
             if bias else None)
        return w, b

    def pack(w, b):
        cout, cin = w.shape[0], w.shape[1]
        mp, cinp = _round_up(cout, 16), _round_up(cin, 8)
        wp = jnp.pad(w, ((0, mp - cout), (0, cinp - cin),
                         (0, 0), (0, 0), (0, 0)))
        # kernel K ordering per kd slice is (kh, kw, cin_pad)
        wk = wp.transpose(2, 0, 3, 4, 1).reshape(3, mp, 9 * cinp)
        bp = (jnp.pad(b, (0, mp - cout)).reshape(mp, 1).astype(jnp.float32)
              if b is not None else None)
        return {'w': wk.astype(jnp.bfloat16), 'b': bp,
                'cout': cout, 'cin': cin, 'mp': mp, 'cinp': cinp}

    def conv_p(cout, cin, bias=True):
        return pack(*raw(cout, cin, bias))

    def fuse(parts):
        """Stack convs that consume the same input into one matmul."""
        w = jnp.concatenate([q[0] for q in parts], axis=0)
        b = jnp.concatenate([q[1] for q in parts], axis=0)
        return pack(w, b)

    def bn_p(ch):
        return {'g': jnp.ones((ch,), jnp.float32),
                'b': jnp.zeros((ch,), jnp.float32)}

    pr = jnp.float32(0.25)   # nn.PReLU() default init

    p = {}
    p['conv0'] = conv_p(din, 6)
    p['conv0_pr'] = pr
    p['conv'] = conv_p(3, din)
    # ConvLSTM: i/f/g/o gate convs fused into one (Cout = 4*din) matmul.
    p['lstm'] = fuse([raw(din, 2 * din) for _ in range(4)])
    p['res'] = [{'c1': conv_p(din, din), 'p1': pr,
                 'c2': conv_p(din, din), 'p2': pr,
                 'p_skip': pr} for _ in range(5)]

    d = din
    at = {}
    at['ce_conv1'] = conv_p(d, 2, bias=False)
    at['ce_bn1'] = bn_p(d)
    at['ce_pr1'] = pr
    at['ce_conv2'] = conv_p(d, d, bias=False)
    at['ce_bn2'] = bn_p(d)
    at['ce_pr2'] = pr
    at['down0_conv'] = conv_p(2 * d, d, bias=False)
    at['down0_bn'] = bn_p(2 * d)
    at['down0_pr'] = pr
    at['down1_conv'] = conv_p(4 * d, 2 * d, bias=False)
    at['down1_bn'] = bn_p(4 * d)
    at['down1_pr'] = pr
    # self-attention: q/k/v convs fused into one (Cout = 4 + 4 + 4d) matmul.
    at['sa'] = {'qkv': fuse([raw(4, 4 * d), raw(4, 4 * d), raw(4 * d, 4 * d)]),
                'gamma': jnp.zeros((1,), jnp.float32)}  # torch.zeros(1) init
    at['up0_conv'] = conv_p(2 * d, 4 * d, bias=False)
    at['up0_bn'] = bn_p(2 * d)
    at['up0_pr'] = pr
    at['up1_conv'] = conv_p(d, 2 * d, bias=False)
    at['up1_bn'] = bn_p(d)
    at['up1_pr'] = pr
    at['out_conv'] = conv_p(d, d)
    p['atten'] = at
    return p


if __name__ == "__main__":
    key = jax.random.PRNGKey(0)
    k1, k2, k3 = jax.random.split(key, 3)

    DIN = 8                        # opt_dim (small for a quick test)
    N, CH, SEQ, ROWS, COLS = 1, 3, 2, 16, 16
    # input: (N, 3, seq, H, W); event: (N, 2, seq+1, H, W)
    inp = jax.random.normal(k1, (N, CH, SEQ, ROWS, COLS), jnp.float32)
    event = jax.random.normal(k2, (N, CH - 1, SEQ + 1, ROWS, COLS),
                              jnp.float32)

    params = init_params(k3, din=DIN)
    out = mpevnet_forward(params, inp, event, iterations=(2, 2, 2), din=DIN)
    out = jax.block_until_ready(out)
    assert out.shape == (N, CH, SEQ, ROWS, COLS), out.shape
    assert bool(jnp.all(jnp.isfinite(out)))
    print("KERNEL_OK")
</pallas_src>

<mosaic_0001>
module attributes {stable_mosaic.version = 11 : i64} {
  func.func @_conv_kernel(%arg0: i32, %arg1: i32, %arg2: memref<1x4x8x256xbf16, #tpu.memory_space<vmem>>, %arg3: memref<3x16x72xbf16, #tpu.memory_space<vmem>>, %arg4: memref<16x1xf32, #tpu.memory_space<vmem>>, %arg5: memref<1x1x16x128xf32, #tpu.memory_space<vmem>>) attributes {dimension_semantics = [#tpu.dimension_semantics<parallel>, #tpu.dimension_semantics<parallel>], iteration_bounds = array<i64: 4, 2>, scalar_prefetch = 0 : i64, scratch_operands = 0 : i64, tpu.core_type = #tpu.core_type<tc>, window_params = [{transform_indices = @transform_0, window_bounds = array<i64: 1, 4, 8, 256>}, {pipeline_mode = #tpu.pipeline_mode<synchronous>, transform_indices = @transform_1, window_bounds = array<i64: 3, 16, 72>}, {pipeline_mode = #tpu.pipeline_mode<synchronous>, transform_indices = @transform_2, window_bounds = array<i64: 16, 1>}, {transform_indices = @transform_3, window_bounds = array<i64: 1, 1, 16, 128>}]} {
    %c0_i32 = arith.constant 0 : i32
    %0 = arith.addi %arg1, %c0_i32 : i32
    %c0 = arith.constant 0 : index
    %1 = arith.index_cast %0 : i32 to index
    %c0_0 = arith.constant 0 : index
    %c0_1 = arith.constant 0 : index
    %2 = vector.load %arg2[%c0, %1, %c0_0, %c0_1] : memref<1x4x8x256xbf16, #tpu.memory_space<vmem>>, vector<1x1x8x128xbf16>
    %3 = vector.shape_cast %2 : vector<1x1x8x128xbf16> to vector<8x128xbf16>
    %c0_i32_2 = arith.constant 0 : i32
    %4 = arith.addi %arg1, %c0_i32_2 : i32
    %c0_3 = arith.constant 0 : index
    %5 = arith.index_cast %4 : i32 to index
    %c0_4 = arith.constant 0 : index
    %c1 = arith.constant 1 : index
    %6 = vector.load %arg2[%c0_3, %5, %c0_4, %c1] : memref<1x4x8x256xbf16, #tpu.memory_space<vmem>>, vector<1x1x8x128xbf16>
    %7 = vector.shape_cast %6 : vector<1x1x8x128xbf16> to vector<8x128xbf16>
    %c0_i32_5 = arith.constant 0 : i32
    %8 = arith.addi %arg1, %c0_i32_5 : i32
    %c0_6 = arith.constant 0 : index
    %9 = arith.index_cast %8 : i32 to index
    %c0_7 = arith.constant 0 : index
    %c2 = arith.constant 2 : index
    %10 = vector.load %arg2[%c0_6, %9, %c0_7, %c2] : memref<1x4x8x256xbf16, #tpu.memory_space<vmem>>, vector<1x1x8x128xbf16>
    %11 = vector.shape_cast %10 : vector<1x1x8x128xbf16> to vector<8x128xbf16>
    %c0_i32_8 = arith.constant 0 : i32
    %12 = arith.addi %arg1, %c0_i32_8 : i32
    %c0_9 = arith.constant 0 : index
    %13 = arith.index_cast %12 : i32 to index
    %c0_10 = arith.constant 0 : index
    %c10 = arith.constant 10 : index
    %14 = vector.load %arg2[%c0_9, %13, %c0_10, %c10] : memref<1x4x8x256xbf16, #tpu.memory_space<vmem>>, vector<1x1x8x128xbf16>
    %15 = vector.shape_cast %14 : vector<1x1x8x128xbf16> to vector<8x128xbf16>
    %c0_i32_11 = arith.constant 0 : i32
    %16 = arith.addi %arg1, %c0_i32_11 : i32
    %c0_12 = arith.constant 0 : index
    %17 = arith.index_cast %16 : i32 to index
    %c0_13 = arith.constant 0 : index
    %c11 = arith.constant 11 : index
    %18 = vector.load %arg2[%c0_12, %17, %c0_13, %c11] : memref<1x4x8x256xbf16, #tpu.memory_space<vmem>>, vector<1x1x8x128xbf16>
    %19 = vector.shape_cast %18 : vector<1x1x8x128xbf16> to vector<8x128xbf16>
    %c0_i32_14 = arith.constant 0 : i32
    %20 = arith.addi %arg1, %c0_i32_14 : i32
    %c0_15 = arith.constant 0 : index
    %21 = arith.index_cast %20 : i32 to index
    %c0_16 = arith.constant 0 : index
    %c12 = arith.constant 12 : index
    %22 = vector.load %arg2[%c0_15, %21, %c0_16, %c12] : memref<1x4x8x256xbf16, #tpu.memory_space<vmem>>, vector<1x1x8x128xbf16>
    %23 = vector.shape_cast %22 : vector<1x1x8x128xbf16> to vector<8x128xbf16>
    %c0_i32_17 = arith.constant 0 : i32
    %24 = arith.addi %arg1, %c0_i32_17 : i32
    %c0_18 = arith.constant 0 : index
    %25 = arith.index_cast %24 : i32 to index
    %c0_19 = arith.constant 0 : index
    %c20 = arith.constant 20 : index
    %26 = vector.load %arg2[%c0_18, %25, %c0_19, %c20] : memref<1x4x8x256xbf16, #tpu.memory_space<vmem>>, vector<1x1x8x128xbf16>
    %27 = vector.shape_cast %26 : vector<1x1x8x128xbf16> to vector<8x128xbf16>
    %c0_i32_20 = arith.constant 0 : i32
    %28 = arith.addi %arg1, %c0_i32_20 : i32
    %c0_21 = arith.constant 0 : index
    %29 = arith.index_cast %28 : i32 to index
    %c0_22 = arith.constant 0 : index
    %c21 = arith.constant 21 : index
    %30 = vector.load %arg2[%c0_21, %29, %c0_22, %c21] : memref<1x4x8x256xbf16, #tpu.memory_space<vmem>>, vector<1x1x8x128xbf16>
    %31 = vector.shape_cast %30 : vector<1x1x8x128xbf16> to vector<8x128xbf16>
    %c0_i32_23 = arith.constant 0 : i32
    %32 = arith.addi %arg1, %c0_i32_23 : i32
    %c0_24 = arith.constant 0 : index
    %33 = arith.index_cast %32 : i32 to index
    %c0_25 = arith.constant 0 : index
    %c22 = arith.constant 22 : index
    %34 = vector.load %arg2[%c0_24, %33, %c0_25, %c22] : memref<1x4x8x256xbf16, #tpu.memory_space<vmem>>, vector<1x1x8x128xbf16>
    %35 = vector.shape_cast %34 : vector<1x1x8x128xbf16> to vector<8x128xbf16>
    %36 = tpu.concatenate %3, %7, %11, %15, %19, %23, %27, %31, %35 in 0 : vector<8x128xbf16>, vector<8x128xbf16>, vector<8x128xbf16>, vector<8x128xbf16>, vector<8x128xbf16>, vector<8x128xbf16>, vector<8x128xbf16>, vector<8x128xbf16>, vector<8x128xbf16> -> vector<72x128xbf16>
    %c0_26 = arith.constant 0 : index
    %c0_27 = arith.constant 0 : index
    %c0_28 = arith.constant 0 : index
    %37 = vector.load %arg3[%c0_26, %c0_27, %c0_28] : memref<3x16x72xbf16, #tpu.memory_space<vmem>>, vector<1x16x72xbf16>
    %38 = vector.shape_cast %37 : vector<1x16x72xbf16> to vector<16x72xbf16>
    %cst = arith.constant dense<0.000000e+00> : vector<16x128xf32>
    %39 = tpu.matmul %38, %36, %cst {dimension_numbers = #tpu.dot_dimension_numbers<[1], [0], [0], [1], [0, 0, 1, 1], [], []>} : vector<16x72xbf16>, vector<72x128xbf16>, vector<16x128xf32> -> vector<16x128xf32>
    %c1_i32 = arith.constant 1 : i32
    %40 = arith.addi %arg1, %c1_i32 : i32
    %c0_29 = arith.constant 0 : index
    %41 = arith.index_cast %40 : i32 to index
    %c0_30 = arith.constant 0 : index
    %c0_31 = arith.constant 0 : index
    %42 = vector.load %arg2[%c0_29, %41, %c0_30, %c0_31] : memref<1x4x8x256xbf16, #tpu.memory_space<vmem>>, vector<1x1x8x128xbf16>
    %43 = vector.shape_cast %42 : vector<1x1x8x128xbf16> to vector<8x128xbf16>
    %c1_i32_32 = arith.constant 1 : i32
    %44 = arith.addi %arg1, %c1_i32_32 : i32
    %c0_33 = arith.constant 0 : index
    %45 = arith.index_cast %44 : i32 to index
    %c0_34 = arith.constant 0 : index
    %c1_35 = arith.constant 1 : index
    %46 = vector.load %arg2[%c0_33, %45, %c0_34, %c1_35] : memref<1x4x8x256xbf16, #tpu.memory_space<vmem>>, vector<1x1x8x128xbf16>
    %47 = vector.shape_cast %46 : vector<1x1x8x128xbf16> to vector<8x128xbf16>
    %c1_i32_36 = arith.constant 1 : i32
    %48 = arith.addi %arg1, %c1_i32_36 : i32
    %c0_37 = arith.constant 0 : index
    %49 = arith.index_cast %48 : i32 to index
    %c0_38 = arith.constant 0 : index
    %c2_39 = arith.constant 2 : index
    %50 = vector.load %arg2[%c0_37, %49, %c0_38, %c2_39] : memref<1x4x8x256xbf16, #tpu.memory_space<vmem>>, vector<1x1x8x128xbf16>
    %51 = vector.shape_cast %50 : vector<1x1x8x128xbf16> to vector<8x128xbf16>
    %c1_i32_40 = arith.constant 1 : i32
    %52 = arith.addi %arg1, %c1_i32_40 : i32
    %c0_41 = arith.constant 0 : index
    %53 = arith.index_cast %52 : i32 to index
    %c0_42 = arith.constant 0 : index
    %c10_43 = arith.constant 10 : index
    %54 = vector.load %arg2[%c0_41, %53, %c0_42, %c10_43] : memref<1x4x8x256xbf16, #tpu.memory_space<vmem>>, vector<1x1x8x128xbf16>
    %55 = vector.shape_cast %54 : vector<1x1x8x128xbf16> to vector<8x128xbf16>
    %c1_i32_44 = arith.constant 1 : i32
    %56 = arith.addi %arg1, %c1_i32_44 : i32
    %c0_45 = arith.constant 0 : index
    %57 = arith.index_cast %56 : i32 to index
    %c0_46 = arith.constant 0 : index
    %c11_47 = arith.constant 11 : index
    %58 = vector.load %arg2[%c0_45, %57, %c0_46, %c11_47] : memref<1x4x8x256xbf16, #tpu.memory_space<vmem>>, vector<1x1x8x128xbf16>
    %59 = vector.shape_cast %58 : vector<1x1x8x128xbf16> to vector<8x128xbf16>
    %c1_i32_48 = arith.constant 1 : i32
    %60 = arith.addi %arg1, %c1_i32_48 : i32
    %c0_49 = arith.constant 0 : index
    %61 = arith.index_cast %60 : i32 to index
    %c0_50 = arith.constant 0 : index
    %c12_51 = arith.constant 12 : index
    %62 = vector.load %arg2[%c0_49, %61, %c0_50, %c12_51] : memref<1x4x8x256xbf16, #tpu.memory_space<vmem>>, vector<1x1x8x128xbf16>
    %63 = vector.shape_cast %62 : vector<1x1x8x128xbf16> to vector<8x128xbf16>
    %c1_i32_52 = arith.constant 1 : i32
    %64 = arith.addi %arg1, %c1_i32_52 : i32
    %c0_53 = arith.constant 0 : index
    %65 = arith.index_cast %64 : i32 to index
    %c0_54 = arith.constant 0 : index
    %c20_55 = arith.constant 20 : index
    %66 = vector.load %arg2[%c0_53, %65, %c0_54, %c20_55] : memref<1x4x8x256xbf16, #tpu.memory_space<vmem>>, vector<1x1x8x128xbf16>
    %67 = vector.shape_cast %66 : vector<1x1x8x128xbf16> to vector<8x128xbf16>
    %c1_i32_56 = arith.constant 1 : i32
    %68 = arith.addi %arg1, %c1_i32_56 : i32
    %c0_57 = arith.constant 0 : index
    %69 = arith.index_cast %68 : i32 to index
    %c0_58 = arith.constant 0 : index
    %c21_59 = arith.constant 21 : index
    %70 = vector.load %arg2[%c0_57, %69, %c0_58, %c21_59] : memref<1x4x8x256xbf16, #tpu.memory_space<vmem>>, vector<1x1x8x128xbf16>
    %71 = vector.shape_cast %70 : vector<1x1x8x128xbf16> to vector<8x128xbf16>
    %c1_i32_60 = arith.constant 1 : i32
    %72 = arith.addi %arg1, %c1_i32_60 : i32
    %c0_61 = arith.constant 0 : index
    %73 = arith.index_cast %72 : i32 to index
    %c0_62 = arith.constant 0 : index
    %c22_63 = arith.constant 22 : index
    %74 = vector.load %arg2[%c0_61, %73, %c0_62, %c22_63] : memref<1x4x8x256xbf16, #tpu.memory_space<vmem>>, vector<1x1x8x128xbf16>
    %75 = vector.shape_cast %74 : vector<1x1x8x128xbf16> to vector<8x128xbf16>
    %76 = tpu.concatenate %43, %47, %51, %55, %59, %63, %67, %71, %75 in 0 : vector<8x128xbf16>, vector<8x128xbf16>, vector<8x128xbf16>, vector<8x128xbf16>, vector<8x128xbf16>, vector<8x128xbf16>, vector<8x128xbf16>, vector<8x128xbf16>, vector<8x128xbf16> -> vector<72x128xbf16>
    %c1_64 = arith.constant 1 : index
    %c0_65 = arith.constant 0 : index
    %c0_66 = arith.constant 0 : index
    %77 = vector.load %arg3[%c1_64, %c0_65, %c0_66] : memref<3x16x72xbf16, #tpu.memory_space<vmem>>, vector<1x16x72xbf16>
    %78 = vector.shape_cast %77 : vector<1x16x72xbf16> to vector<16x72xbf16>
    %cst_67 = arith.constant dense<0.000000e+00> : vector<16x128xf32>
    %79 = tpu.matmul %78, %76, %cst_67 {dimension_numbers = #tpu.dot_dimension_numbers<[1], [0], [0], [1], [0, 0, 1, 1], [], []>} : vector<16x72xbf16>, vector<72x128xbf16>, vector<16x128xf32> -> vector<16x128xf32>
    %80 = arith.addf %39, %79 : vector<16x128xf32>
    %c2_i32 = arith.constant 2 : i32
    %81 = arith.addi %arg1, %c2_i32 : i32
    %c0_68 = arith.constant 0 : index
    %82 = arith.index_cast %81 : i32 to index
    %c0_69 = arith.constant 0 : index
    %c0_70 = arith.constant 0 : index
    %83 = vector.load %arg2[%c0_68, %82, %c0_69, %c0_70] : memref<1x4x8x256xbf16, #tpu.memory_space<vmem>>, vector<1x1x8x128xbf16>
    %84 = vector.shape_cast %83 : vector<1x1x8x128xbf16> to vector<8x128xbf16>
    %c2_i32_71 = arith.constant 2 : i32
    %85 = arith.addi %arg1, %c2_i32_71 : i32
    %c0_72 = arith.constant 0 : index
    %86 = arith.index_cast %85 : i32 to index
    %c0_73 = arith.constant 0 : index
    %c1_74 = arith.constant 1 : index
    %87 = vector.load %arg2[%c0_72, %86, %c0_73, %c1_74] : memref<1x4x8x256xbf16, #tpu.memory_space<vmem>>, vector<1x1x8x128xbf16>
    %88 = vector.shape_cast %87 : vector<1x1x8x128xbf16> to vector<8x128xbf16>
    %c2_i32_75 = arith.constant 2 : i32
    %89 = arith.addi %arg1, %c2_i32_75 : i32
    %c0_76 = arith.constant 0 : index
    %90 = arith.index_cast %89 : i32 to index
    %c0_77 = arith.constant 0 : index
    %c2_78 = arith.constant 2 : index
    %91 = vector.load %arg2[%c0_76, %90, %c0_77, %c2_78] : memref<1x4x8x256xbf16, #tpu.memory_space<vmem>>, vector<1x1x8x128xbf16>
    %92 = vector.shape_cast %91 : vector<1x1x8x128xbf16> to vector<8x128xbf16>
    %c2_i32_79 = arith.constant 2 : i32
    %93 = arith.addi %arg1, %c2_i32_79 : i32
    %c0_80 = arith.constant 0 : index
    %94 = arith.index_cast %93 : i32 to index
    %c0_81 = arith.constant 0 : index
    %c10_82 = arith.constant 10 : index
    %95 = vector.load %arg2[%c0_80, %94, %c0_81, %c10_82] : memref<1x4x8x256xbf16, #tpu.memory_space<vmem>>, vector<1x1x8x128xbf16>
    %96 = vector.shape_cast %95 : vector<1x1x8x128xbf16> to vector<8x128xbf16>
    %c2_i32_83 = arith.constant 2 : i32
    %97 = arith.addi %arg1, %c2_i32_83 : i32
    %c0_84 = arith.constant 0 : index
    %98 = arith.index_cast %97 : i32 to index
    %c0_85 = arith.constant 0 : index
    %c11_86 = arith.constant 11 : index
    %99 = vector.load %arg2[%c0_84, %98, %c0_85, %c11_86] : memref<1x4x8x256xbf16, #tpu.memory_space<vmem>>, vector<1x1x8x128xbf16>
    %100 = vector.shape_cast %99 : vector<1x1x8x128xbf16> to vector<8x128xbf16>
    %c2_i32_87 = arith.constant 2 : i32
    %101 = arith.addi %arg1, %c2_i32_87 : i32
    %c0_88 = arith.constant 0 : index
    %102 = arith.index_cast %101 : i32 to index
    %c0_89 = arith.constant 0 : index
    %c12_90 = arith.constant 12 : index
    %103 = vector.load %arg2[%c0_88, %102, %c0_89, %c12_90] : memref<1x4x8x256xbf16, #tpu.memory_space<vmem>>, vector<1x1x8x128xbf16>
    %104 = vector.shape_cast %103 : vector<1x1x8x128xbf16> to vector<8x128xbf16>
    %c2_i32_91 = arith.constant 2 : i32
    %105 = arith.addi %arg1, %c2_i32_91 : i32
    %c0_92 = arith.constant 0 : index
    %106 = arith.index_cast %105 : i32 to index
    %c0_93 = arith.constant 0 : index
    %c20_94 = arith.constant 20 : index
    %107 = vector.load %arg2[%c0_92, %106, %c0_93, %c20_94] : memref<1x4x8x256xbf16, #tpu.memory_space<vmem>>, vector<1x1x8x128xbf16>
    %108 = vector.shape_cast %107 : vector<1x1x8x128xbf16> to vector<8x128xbf16>
    %c2_i32_95 = arith.constant 2 : i32
    %109 = arith.addi %arg1, %c2_i32_95 : i32
    %c0_96 = arith.constant 0 : index
    %110 = arith.index_cast %109 : i32 to index
    %c0_97 = arith.constant 0 : index
    %c21_98 = arith.constant 21 : index
    %111 = vector.load %arg2[%c0_96, %110, %c0_97, %c21_98] : memref<1x4x8x256xbf16, #tpu.memory_space<vmem>>, vector<1x1x8x128xbf16>
    %112 = vector.shape_cast %111 : vector<1x1x8x128xbf16> to vector<8x128xbf16>
    %c2_i32_99 = arith.constant 2 : i32
    %113 = arith.addi %arg1, %c2_i32_99 : i32
    %c0_100 = arith.constant 0 : index
    %114 = arith.index_cast %113 : i32 to index
    %c0_101 = arith.constant 0 : index
    %c22_102 = arith.constant 22 : index
    %115 = vector.load %arg2[%c0_100, %114, %c0_101, %c22_102] : memref<1x4x8x256xbf16, #tpu.memory_space<vmem>>, vector<1x1x8x128xbf16>
    %116 = vector.shape_cast %115 : vector<1x1x8x128xbf16> to vector<8x128xbf16>
    %117 = tpu.concatenate %84, %88, %92, %96, %100, %104, %108, %112, %116 in 0 : vector<8x128xbf16>, vector<8x128xbf16>, vector<8x128xbf16>, vector<8x128xbf16>, vector<8x128xbf16>, vector<8x128xbf16>, vector<8x128xbf16>, vector<8x128xbf16>, vector<8x128xbf16> -> vector<72x128xbf16>
    %c2_103 = arith.constant 2 : index
    %c0_104 = arith.constant 0 : index
    %c0_105 = arith.constant 0 : index
    %118 = vector.load %arg3[%c2_103, %c0_104, %c0_105] : memref<3x16x72xbf16, #tpu.memory_space<vmem>>, vector<1x16x72xbf16>
    %119 = vector.shape_cast %118 : vector<1x16x72xbf16> to vector<16x72xbf16>
    %cst_106 = arith.constant dense<0.000000e+00> : vector<16x128xf32>
    %120 = tpu.matmul %119, %117, %cst_106 {dimension_numbers = #tpu.dot_dimension_numbers<[1], [0], [0], [1], [0, 0, 1, 1], [], []>} : vector<16x72xbf16>, vector<72x128xbf16>, vector<16x128xf32> -> vector<16x128xf32>
    %121 = arith.addf %80, %120 : vector<16x128xf32>
    %c0_107 = arith.constant 0 : index
    %c0_108 = arith.constant 0 : index
    %122 = vector.load %arg4[%c0_107, %c0_108] : memref<16x1xf32, #tpu.memory_space<vmem>>, vector<16x1xf32>
    %123 = vector.broadcast %122 : vector<16x1xf32> to vector<16x128xf32>
    %124 = arith.addf %121, %123 : vector<16x128xf32>
    %cst_109 = arith.constant 0.000000e+00 : f32
    %125 = vector.broadcast %cst_109 : f32 to vector<16x128xf32>
    %126 = arith.cmpf oge, %124, %125 : vector<16x128xf32>
    %cst_110 = arith.constant 2.500000e-01 : f32
    %127 = vector.broadcast %cst_110 : f32 to vector<16x128xf32>
    %128 = arith.mulf %124, %127 : vector<16x128xf32>
    %129 = arith.select %126, %124, %128 : vector<16x128xi1>, vector<16x128xf32>
    %c0_111 = arith.constant 0 : index
    %c0_112 = arith.constant 0 : index
    %c0_113 = arith.constant 0 : index
    %c0_114 = arith.constant 0 : index
    %130 = vector.load %arg5[%c0_111, %c0_112, %c0_113, %c0_114] : memref<1x1x16x128xf32, #tpu.memory_space<vmem>>, vector<1x1x16x128xf32>
    %131 = vector.shape_cast %130 : vector<1x1x16x128xf32> to vector<16x128xf32>
    %132 = vector.shape_cast %129 : vector<16x128xf32> to vector<1x1x16x128xf32>
    tpu.vector_store %arg5[%c0_111, %c0_112, %c0_113, %c0_114], %132 {strides = array<i32>} : memref<1x1x16x128xf32, #tpu.memory_space<vmem>>, vector<1x1x16x128xf32>,
    return
  }
  func.func @transform_0(%arg0: i32, %arg1: i32) -> (i32, i32, i32, i32) {
    %c0_i32 = arith.constant 0 : i32
    %c0_i32_0 = arith.constant 0 : i32
    %c0_i32_1 = arith.constant 0 : i32
    %c0_i32_2 = arith.constant 0 : i32
    return %arg0, %c0_i32, %c0_i32_0, %c0_i32_1 : i32, i32, i32, i32
  }
  func.func @transform_1(%arg0: i32, %arg1: i32) -> (i32, i32, i32) {
    %c0_i32 = arith.constant 0 : i32
    %c0_i32_0 = arith.constant 0 : i32
    %c0_i32_1 = arith.constant 0 : i32
    %c0_i32_2 = arith.constant 0 : i32
    return %c0_i32, %c0_i32_0, %c0_i32_1 : i32, i32, i32
  }
  func.func @transform_2(%arg0: i32, %arg1: i32) -> (i32, i32) {
    %c0_i32 = arith.constant 0 : i32
    %c0_i32_0 = arith.constant 0 : i32
    %c0_i32_1 = arith.constant 0 : i32
    return %c0_i32, %c0_i32_0 : i32, i32
  }
  func.func @transform_3(%arg0: i32, %arg1: i32) -> (i32, i32, i32, i32) {
    %c0_i32 = arith.constant 0 : i32
    %c0_i32_0 = arith.constant 0 : i32
    %c0_i32_1 = arith.constant 0 : i32
    return %arg0, %arg1, %c0_i32, %c0_i32_0 : i32, i32, i32, i32
  }
}

</mosaic_0001>

<llo_original>
// kernel: tpu_custom_call.1
$region0: #{tpu_custom_call.1}
  #allocation0 [shape = 'u32[]', space=smem, size = 0x4, offset = 0x4, fixed_abs, tag = 'smem constant byte address 0x4 - core index']
  #allocation1 [shape = 'u32[144,128]{1,0:T(1,128)}', space=vmem, size = 0x12000, scoped, tag = 'internal scratch']
  %s0 = inlined_call_operand.hbm [shape: bf16[4,4,8,256], index: 0, kind: input, shape index: {}]
  %s1 = inlined_call_operand.hbm [shape: bf16[3,16,72], index: 1, kind: input, shape index: {}]
  %s2 = inlined_call_operand.vmem [shape: f32[16,1], index: 2, kind: input, shape index: {}]
  %s3 = inlined_call_operand.hbm [shape: f32[4,2,16,128], index: 3, kind: output, shape index: {}]
  %s4 = sld [smem:[#allocation0]]
  $region53: #{tpu_custom_call.1} parent=0
    _
  %s6 = ssub.s32 1, %s4
  %s7 = scalar_select 0, %s6, %s4
  $region1: #{tpu_custom_call.1} parent=0
    #allocation2 [shape = 'u8[32768]{0}', space=vmem, size = 0x8000, scoped, tag = 'input window, operand 0']
    #allocation3 [shape = 's32[2]{0}', space=sflag, size = 0x8, scoped, tag = 'scoped memory for tpu_custom_call.1']
    #allocation4 [shape = 's32[2]{0}', space=sflag, size = 0x8, scoped, tag = 'scoped memory for tpu_custom_call.1']
    #allocation5 [shape = 'u8[12288]{0}', space=vmem, size = 0x3000, scoped, tag = 'input window, operand 1, single buffered']
    #allocation6 [shape = 's32[1]{0}', space=sflag, size = 0x4, scoped, tag = 'scoped memory for tpu_custom_call.1']
    #allocation7 [shape = 'u8[16384]{0}', space=vmem, size = 0x4000, scoped, tag = 'output window, operand 0']
    %8 = vsyncpa [#allocation3], 0
    %s9 = scalar_lea.sflag [#allocation3], 1
    %10 = vsyncpa %s9, 0
    %11 = vsyncpa [#allocation6], 0
    %12 = vsyncpa [#allocation4], 0
    %s13 = scalar_lea.sflag [#allocation4], 1
    %14 = vsyncpa %s13, 0
    loop: start=0, step=1, limit=10
    $region2: #{tpu_custom_call.1} parent=1 // loop_pre_header
      _
    $region3: #{tpu_custom_call.1} parent=1 // loop_header
      %s16 = sphi 0, %s20
      %p17 = scmp.ge.s32.totalorder %s16, 10
      %s23 = sphi 0, %s35
      %s24 = sphi 0, %s31
      %s25 = sphi 0, %s23
      %s26 = sphi 0, %s24
      %s27 = sphi 0, %s25
      %s28 = sphi 0, %s26
      %s38 = sphi 0, %s40
      %s41 = sphi 0, %s38
      %s42 = sphi 0, %s41
      %s58 = sphi 0, %s42
      %s62 = sphi 0, %s62
      %s64 = sphi 0, %s62
      %s65 = sphi 0, %s64
      %s79 = sphi 0, %s65
      %s83 = sphi 0, %s83
      %s85 = sphi 0, %s83
      %s86 = sphi 0, %s85
      %s100 = sphi 0, %s86
      %s108 = sphi 0, %s110
      %s111 = sphi 0, %s108
      %s112 = sphi 0, %s111
      %s128 = sphi 0, %s112
    $region4: #{tpu_custom_call.1} parent=1 // loop_header_branch
      %19 = sbr.rel (%p17) target = $region8
    $region5: #{tpu_custom_call.1} parent=1 // loop_body
      %s21 = ssub.s32 %s16, 1
      %s22 = ssub.s32 %s16, 2
      %s29 = sadd.s32 1, %s24
      %p30 = scmp.ge.s32.totalorder %s29, 2
      %s31 = scalar_select %p30, 0, %s29
      %s32 = sadd.s32 1, %s23
      %s33 = scalar_select %p30, %s32, %s23
      %p34 = scmp.ge.s32.totalorder %s33, 4
      %s35 = scalar_select %p34, 0, %s33
      %s36 = ssub.s32 %s23, %s35
      %p37 = scmp.eq.s32.totalorder %s36, 0
      %s39 = sadd.s32 %s38, 1
      %s40 = scalar_select %p37, %s38, %s39
      %p43 = pneg %p37
      %p44 = scmp.eq.s32.totalorder %s16, 7
      %p45 = por %p43, %p44
      %p46 = scmp.ne.s32.totalorder %s38, %s41
      %p47 = scmp.eq.s32.totalorder %s16, 0
      %p48 = por %p46, %p47
      %p49 = scmp.ne.s32.totalorder %s38, %s41
      %p50 = scmp.eq.s32.totalorder %s21, 7
      %p51 = por %p49, %p50
      %p52 = scmp.ne.s32.totalorder %s41, %s42
      %p53 = scmp.eq.s32.totalorder %s21, 0
      %p54 = por %p52, %p53
      %p55 = scmp.ne.s32.totalorder %s41, %s42
      %p56 = scmp.eq.s32.totalorder %s22, 7
      %p57 = por %p55, %p56
      %p59 = scmp.ne.s32.totalorder %s42, %s58
      %p60 = scmp.eq.s32.totalorder %s22, 0
      %p61 = por %p59, %p60
      %s63 = sadd.s32 %s62, 1
      %p66 = scmp.eq.s32.totalorder %s16, 7
      %p67 = scmp.ne.s32.totalorder %s62, %s64
      %p68 = scmp.eq.s32.totalorder %s16, 0
      %p69 = por %p67, %p68
      %p70 = scmp.ne.s32.totalorder %s62, %s64
      %p71 = scmp.eq.s32.totalorder %s21, 7
      %p72 = por %p70, %p71
      %p73 = scmp.ne.s32.totalorder %s64, %s65
      %p74 = scmp.eq.s32.totalorder %s21, 0
      %p75 = por %p73, %p74
      %p76 = scmp.ne.s32.totalorder %s64, %s65
      %p77 = scmp.eq.s32.totalorder %s22, 7
      %p78 = por %p76, %p77
      %p80 = scmp.ne.s32.totalorder %s65, %s79
      %p81 = scmp.eq.s32.totalorder %s22, 0
      %p82 = por %p80, %p81
      %s84 = sadd.s32 %s83, 1
      %p87 = scmp.eq.s32.totalorder %s16, 7
      %p88 = scmp.ne.s32.totalorder %s83, %s85
      %p89 = scmp.eq.s32.totalorder %s16, 0
      %p90 = por %p88, %p89
      %p91 = scmp.ne.s32.totalorder %s83, %s85
      %p92 = scmp.eq.s32.totalorder %s21, 7
      %p93 = por %p91, %p92
      %p94 = scmp.ne.s32.totalorder %s85, %s86
      %p95 = scmp.eq.s32.totalorder %s21, 0
      %p96 = por %p94, %p95
      %p97 = scmp.ne.s32.totalorder %s85, %s86
      %p98 = scmp.eq.s32.totalorder %s22, 7
      %p99 = por %p97, %p98
      %p101 = scmp.ne.s32.totalorder %s86, %s100
      %p102 = scmp.eq.s32.totalorder %s22, 0
      %p103 = por %p101, %p102
      %s104 = ssub.s32 %s23, %s35
      %s105 = ssub.s32 %s24, %s31
      %s106 = sor.u32 %s104, %s105
      %p107 = scmp.eq.s32.totalorder %s106, 0
      %s109 = sadd.s32 %s108, 1
      %s110 = scalar_select %p107, %s108, %s109
      %p113 = pneg %p107
      %p114 = scmp.eq.s32.totalorder %s16, 7
      %p115 = por %p113, %p114
      %p116 = scmp.ne.s32.totalorder %s108, %s111
      %p117 = scmp.eq.s32.totalorder %s16, 0
      %p118 = por %p116, %p117
      %p119 = scmp.ne.s32.totalorder %s108, %s111
      %p120 = scmp.eq.s32.totalorder %s21, 7
      %p121 = por %p119, %p120
      %p122 = scmp.ne.s32.totalorder %s111, %s112
      %p123 = scmp.eq.s32.totalorder %s21, 0
      %p124 = por %p122, %p123
      %p125 = scmp.ne.s32.totalorder %s111, %s112
      %p126 = scmp.eq.s32.totalorder %s22, 7
      %p127 = por %p125, %p126
      %p129 = scmp.ne.s32.totalorder %s112, %s128
      %p130 = scmp.eq.s32.totalorder %s22, 0
      %p131 = por %p129, %p130
      %p132 = scmp.le.s32.totalorder 1, %s16
      %p133 = scmp.lt.s32.totalorder %s16, 9
      %p134 = pnand %p132, %p133
      %p135 = pneg %p134
      // Predicated region
      $region9: #{tpu_custom_call.1} parent=5 // pred_check
        _
      $region10: #{tpu_custom_call.1} parent=5 // pred_check_branch
        %137 = sbr.rel (%p134) target = $region12
      $region11: #{tpu_custom_call.1} parent=5 // pred_region
        %s138 = ssub.s32 %s16, 1
        // Predicated region
        $region13: #{tpu_custom_call.1} parent=11 // pred_check
          %p139 = pneg %p75
        $region14: #{tpu_custom_call.1} parent=11 // pred_check_branch
          %141 = sbr.rel (%p139) target = $region16
        $region15: #{tpu_custom_call.1} parent=11 // pred_region
          %s143 = ssub.s32 384, 384
          %144 = vsyncadd [#allocation6], %s143
          %s145 = sshll.u32 [#allocation5], 4
          %s146 = int_to_ptr.vmem [resolvable:$true] %s145
          %151 = dma.hbm_to_vmem [thread:$0]  %s1, 384, %s146, [#allocation6], 64, 64, 4
        $region16: #{tpu_custom_call.1} parent=11 // pred_fallthru
          _
        // Predicated region
        $region17: #{tpu_custom_call.1} parent=11 // pred_check
          %p152 = pneg %p96
        $region18: #{tpu_custom_call.1} parent=11 // pred_check_branch
          %154 = sbr.rel (%p152) target = $region20
        $region19: #{tpu_custom_call.1} parent=11 // pred_region
          _
        $region20: #{tpu_custom_call.1} parent=11 // pred_fallthru
          _
      $region12: #{tpu_custom_call.1} parent=5 // pred_fallthru
        _
      %p155 = scmp.lt.s32.totalorder %s16, 8
      // Predicated region
      $region21: #{tpu_custom_call.1} parent=5 // pred_check
        %p156 = pneg %p155
      $region22: #{tpu_custom_call.1} parent=5 // pred_check_branch
        %158 = sbr.rel (%p156) target = $region24
      $region23: #{tpu_custom_call.1} parent=5 // pred_region
        // Predicated region
        $region25: #{tpu_custom_call.1} parent=23 // pred_check
          %p159 = pneg %p48
        $region26: #{tpu_custom_call.1} parent=23 // pred_check_branch
          %161 = sbr.rel (%p159) target = $region28
        $region27: #{tpu_custom_call.1} parent=23 // pred_region
          %s162 = sand.u32 %s38, 1
          %s163 = scalar_lea.sflag [#allocation3], %s162
          %s164 = sand.u32 %s38, 1
          %s165 = smul.addr %s164, 32
          %s166 = scalar_lea.vmem [#allocation2], %s165
          %s168 = ssub.s32 512, 512
          %169 = vsyncadd %s163, %s168
          %s170 = smul.addr %s23, 8
          %s171 = smul.addr %s170, 64
          %s172 = scalar_lea.hbm %s0, %s171
          %s173 = sshll.u32 %s166, 4
          %s174 = int_to_ptr.vmem [resolvable:$true] %s173
          %179 = dma.hbm_to_vmem [thread:$0]  %s172, 512, %s174, %s163, 128, 128, 8
        $region28: #{tpu_custom_call.1} parent=23 // pred_fallthru
          _
      $region24: #{tpu_custom_call.1} parent=5 // pred_fallthru
        _
      %p180 = scmp.le.s32.totalorder 1, %s16
      %p181 = scmp.lt.s32.totalorder %s16, 9
      %p182 = pnand %p180, %p181
      %p183 = pneg %p182
      // Predicated region
      $region29: #{tpu_custom_call.1} parent=5 // pred_check
        _
      $region30: #{tpu_custom_call.1} parent=5 // pred_check_branch
        %185 = sbr.rel (%p182) target = $region32
      $region31: #{tpu_custom_call.1} parent=5 // pred_region
        %s186 = ssub.s32 %s16, 1
        %s187 = sand.u32 %s41, 1
        %s188 = scalar_lea.sflag [#allocation3], %s187
        %s189 = sand.u32 %s41, 1
        %s190 = smul.addr %s189, 32
        %s191 = scalar_lea.vmem [#allocation2], %s190
        // Predicated region
        $region33: #{tpu_custom_call.1} parent=31 // pred_check
          %p192 = pneg %p54
        $region34: #{tpu_custom_call.1} parent=31 // pred_check_branch
          %194 = sbr.rel (%p192) target = $region36
        $region35: #{tpu_custom_call.1} parent=31 // pred_region
          %195 = dma.done %s188, 512
        $region36: #{tpu_custom_call.1} parent=31 // pred_fallthru
          _
        // Predicated region
        $region37: #{tpu_custom_call.1} parent=31 // pred_check
          %p196 = pneg %p75
        $region38: #{tpu_custom_call.1} parent=31 // pred_check_branch
          %198 = sbr.rel (%p196) target = $region40
        $region39: #{tpu_custom_call.1} parent=31 // pred_region
          %199 = dma.done [#allocation6], 384
        $region40: #{tpu_custom_call.1} parent=31 // pred_fallthru
          _
        %s200 = sand.u32 %s41, 1
        %s201 = scalar_lea.sflag [#allocation3], %s200
        %s202 = sand.u32 %s41, 1
        %s203 = smul.addr %s202, 32
        %s204 = scalar_lea.vmem [#allocation2], %s203
        %p205 = pneg %p54
        %p206 = pneg %p51
        %p207 = pneg %p75
        %p208 = pneg %p72
        %p209 = pneg %p96
        %p210 = pneg %p93
        %p211 = pneg %p124
        %p212 = pneg %p121
        %s213 = sand.u32 %s111, 1
        %s214 = scalar_lea.sflag [#allocation4], %s213
        %s215 = sand.u32 %s111, 1
        %s216 = smul.addr %s215, 16
        %s217 = scalar_lea.vmem [#allocation7], %s216
        %s219 = smul.u32 %s26, 2
        %s220 = smul.addr %s219, 4
        %s221 = scalar_lea.vmem %s191, %s220 [#allocation2]
        %v222 = vld [vmem:[%s221] sm:$0xf]
        %v223 = vld [vmem:[%s221] sm:$0xff]
        %v225 = vunpack.c.l.b16 %v223
        %v226 = vunpack.c.h.b16 %v223
        %v227 = vpack.c.b16 %v225, %v225
        %v228 = vpack.c.b16 %v226, %v226
        %229 = vrot.lane.b32.xlu0 %v227, 127
        %v230 = vpop.permute.xlu0 %229
        %231 = vrot.lane.b32.xlu0 %v228, 127
        %v232 = vpop.permute.xlu0 %231
        %vm233 = vcmask 1039360
        %v234 = vsel %vm233, %v230, %v232
        %235 = vrot.lane.b32.xlu0 %v227, 126
        %v236 = vpop.permute.xlu0 %235
        %237 = vrot.lane.b32.xlu0 %v228, 126
        %v238 = vpop.permute.xlu0 %237
        %vm239 = vcmask 1031168
        %v240 = vsel %vm239, %v236, %v238
        %241 = vrot.lane.b32.xlu0 %v227, 118
        %v242 = vpop.permute.xlu0 %241
        %243 = vrot.lane.b32.xlu0 %v228, 118
        %v244 = vpop.permute.xlu0 %243
        %vm245 = vcmask 965632
        %v246 = vsel %vm245, %v242, %v244
        %247 = vrot.lane.b32.xlu0 %v227, 117
        %v248 = vpop.permute.xlu0 %247
        %249 = vrot.lane.b32.xlu0 %v228, 117
        %v250 = vpop.permute.xlu0 %249
        %vm251 = vcmask 957440
        %v252 = vsel %vm251, %v248, %v250
        %253 = vrot.lane.b32.xlu0 %v227, 116
        %v254 = vpop.permute.xlu0 %253
        %255 = vrot.lane.b32.xlu0 %v228, 116
        %v256 = vpop.permute.xlu0 %255
        %vm257 = vcmask 949248
        %v258 = vsel %vm257, %v254, %v256
        %259 = vrot.lane.b32.xlu0 %v227, 108
        %v260 = vpop.permute.xlu0 %259
        %261 = vrot.lane.b32.xlu0 %v228, 108
        %v262 = vpop.permute.xlu0 %261
        %vm263 = vcmask 883712
        %v264 = vsel %vm263, %v260, %v262
        %265 = vrot.lane.b32.xlu0 %v227, 107
        %v266 = vpop.permute.xlu0 %265
        %267 = vrot.lane.b32.xlu0 %v228, 107
        %v268 = vpop.permute.xlu0 %267
        %vm269 = vcmask 875520
        %v270 = vsel %vm269, %v266, %v268
        %271 = vrot.lane.b32.xlu0 %v227, 106
        %v272 = vpop.permute.xlu0 %271
        %273 = vrot.lane.b32.xlu0 %v228, 106
        %v274 = vpop.permute.xlu0 %273
        %vm275 = vcmask 867328
        %v276 = vsel %vm275, %v272, %v274
        %vm277 = vcmask 1043456
        %v280 = vsel %vm277, %v222, %v234
        %v284 = vsel %vm277, %v240, %v246
        %v288 = vsel %vm277, %v252, %v258
        %v292 = vsel %vm277, %v264, %v270
        %v294 = vld [vmem:[#allocation5] sm:$0xf]
        %v295 = vld [vmem:[#allocation5 + $0x4] sm:$0xf]
        %s296 = sadd.s32 %s26, 1
        %s297 = smul.u32 %s296, 2
        %s298 = smul.addr %s297, 4
        %s299 = scalar_lea.vmem %s191, %s298 [#allocation2]
        %v300 = vld [vmem:[%s299] sm:$0xf]
        %v301 = vld [vmem:[%s299] sm:$0xff]
        %v303 = vunpack.c.l.b16 %v301
        %v304 = vunpack.c.h.b16 %v301
        %v305 = vpack.c.b16 %v303, %v303
        %v306 = vpack.c.b16 %v304, %v304
        %307 = vrot.lane.b32.xlu0 %v305, 127
        %v308 = vpop.permute.xlu0 %307
        %309 = vrot.lane.b32.xlu0 %v306, 127
        %v310 = vpop.permute.xlu0 %309
        %v311 = vsel %vm233, %v308, %v310
        %312 = vrot.lane.b32.xlu0 %v305, 126
        %v313 = vpop.permute.xlu0 %312
        %314 = vrot.lane.b32.xlu0 %v306, 126
        %v315 = vpop.permute.xlu0 %314
        %v316 = vsel %vm239, %v313, %v315
        %317 = vrot.lane.b32.xlu0 %v305, 118
        %v318 = vpop.permute.xlu0 %317
        %319 = vrot.lane.b32.xlu0 %v306, 118
        %v320 = vpop.permute.xlu0 %319
        %v321 = vsel %vm245, %v318, %v320
        %322 = vrot.lane.b32.xlu0 %v305, 117
        %v323 = vpop.permute.xlu0 %322
        %324 = vrot.lane.b32.xlu0 %v306, 117
        %v325 = vpop.permute.xlu0 %324
        %v326 = vsel %vm251, %v323, %v325
        %327 = vrot.lane.b32.xlu0 %v305, 116
        %v328 = vpop.permute.xlu0 %327
        %329 = vrot.lane.b32.xlu0 %v306, 116
        %v330 = vpop.permute.xlu0 %329
        %v331 = vsel %vm257, %v328, %v330
        %332 = vrot.lane.b32.xlu0 %v305, 108
        %v333 = vpop.permute.xlu0 %332
        %334 = vrot.lane.b32.xlu0 %v306, 108
        %v335 = vpop.permute.xlu0 %334
        %v336 = vsel %vm263, %v333, %v335
        %337 = vrot.lane.b32.xlu0 %v305, 107
        %v338 = vpop.permute.xlu0 %337
        %339 = vrot.lane.b32.xlu0 %v306, 107
        %v340 = vpop.permute.xlu0 %339
        %v341 = vsel %vm269, %v338, %v340
        %342 = vrot.lane.b32.xlu0 %v305, 106
        %v343 = vpop.permute.xlu0 %342
        %344 = vrot.lane.b32.xlu0 %v306, 106
        %v345 = vpop.permute.xlu0 %344
        %v346 = vsel %vm275, %v343, %v345
        %v349 = vsel %vm277, %v300, %v311
        %v353 = vsel %vm277, %v316, %v321
        %v357 = vsel %vm277, %v326, %v331
        %v361 = vsel %vm277, %v336, %v341
        %s363 = scalar_lea.vmem [#allocation5], 8
        %v364 = vld [vmem:[%s363] sm:$0xf]
        %v365 = vld [vmem:[%s363 + $0x4] sm:$0xf]
        %v368 = vunpack.c.l.b16 %v364
        %v369 = vunpack.c.l.b16 %v365
        %v370 = vpack.c.b16 %v369, %v368
        %vm371 = vcmask 588800
        %v373 = vsel %vm371, %v370, 0
        %v376 = vsel %vm277, %v346, 0
        %378 = vmatprep.subr.bf16.mxu0 0
        %379 = vmatpush1.bf16.msra.mxu0 %v349
        %380 = vmatprep.subr.bf16.mxu0 0
        %381 = vmatpush1.bf16.msra.mxu0 %v353
        %382 = vmatprep.subr.bf16.mxu0 0
        %383 = vmatpush1.bf16.msra.mxu0 %v357
        %384 = vmatprep.subr.bf16.mxu0 0
        %385 = vmatpush1.bf16.msra.mxu0 %v361
        %386 = vmatprep.subr.bf16.mxu0 0
        %387 = vmatpush1.bf16.msra.mxu0 %v376
        %388 = vmatprep.subr.bf16.mxu0 0
        %389 = vmatpush1.bf16.msra.mxu0 0
        %390 = vmatprep.subr.bf16.mxu0 0
        %391 = vmatpush1.bf16.msra.mxu0 0
        %392 = vmatprep.subr.bf16.mxu0 0
        %393 = vmatpush1.bf16.msra.mxu0 0
        %394 = vmatprep.subr.bf16.mxu0 0
        %395 = vmatpush1.bf16.msra.mxu0 0
        %396 = vmatprep.subr.bf16.mxu0 0
        %397 = vmatpush1.bf16.msra.mxu0 0
        %398 = vmatprep.subr.bf16.mxu0 0
        %399 = vmatpush1.bf16.msra.mxu0 0
        %400 = vmatprep.subr.bf16.mxu0 0
        %401 = vmatpush1.bf16.msra.mxu0 0
        %402 = vmatprep.subr.bf16.mxu0 0
        %403 = vmatpush1.bf16.msra.mxu0 0
        %404 = vmatprep.subr.bf16.mxu0 0
        %405 = vmatpush1.bf16.msra.mxu0 0
        %406 = vmatprep.subr.bf16.mxu0 0
        %407 = vmatpush1.bf16.msra.mxu0 0
        %408 = vmatprep.subr.bf16.mxu0 0
        %409 = vmatpush1.bf16.msra.mxu0 0
        %410 = vmatprep.mubr.bf16.mxu0 0
        %411 = vmatmul.mubr.bf16.gmra.mrb[0].mxu0 %v373
        %v412 = vpop.f32.mrb[0].mxu0
        %v413 = vadd.f32 0.0, %v412
        %v414 = vpop.f32.mrb[0].mxu0
        %v415 = vpop.f32.mrb[0].mxu0
        %v416 = vadd.f32 0.0, %v415
        %v417 = vpop.f32.mrb[0].mxu0
        %418 = vdwg.mxu0
        %v421 = vunpack.c.l.b16 %v294
        %v422 = vunpack.c.l.b16 %v295
        %v423 = vpack.c.b16 %v422, %v421
        %v425 = vsel %vm371, %v423, 0
        %v428 = vsel %vm277, %v276, 0
        %430 = vmatprep.subr.bf16.mxu0 0
        %431 = vmatpush1.bf16.msra.mxu0 %v280
        %432 = vmatprep.subr.bf16.mxu0 0
        %433 = vmatpush1.bf16.msra.mxu0 %v284
        %434 = vmatprep.subr.bf16.mxu0 0
        %435 = vmatpush1.bf16.msra.mxu0 %v288
        %436 = vmatprep.subr.bf16.mxu0 0
        %437 = vmatpush1.bf16.msra.mxu0 %v292
        %438 = vmatprep.subr.bf16.mxu0 0
        %439 = vmatpush1.bf16.msra.mxu0 %v428
        %440 = vmatprep.subr.bf16.mxu0 0
        %441 = vmatpush1.bf16.msra.mxu0 0
        %442 = vmatprep.subr.bf16.mxu0 0
        %443 = vmatpush1.bf16.msra.mxu0 0
        %444 = vmatprep.subr.bf16.mxu0 0
        %445 = vmatpush1.bf16.msra.mxu0 0
        %446 = vmatprep.subr.bf16.mxu0 0
        %447 = vmatpush1.bf16.msra.mxu0 0
        %448 = vmatprep.subr.bf16.mxu0 0
        %449 = vmatpush1.bf16.msra.mxu0 0
        %450 = vmatprep.subr.bf16.mxu0 0
        %451 = vmatpush1.bf16.msra.mxu0 0
        %452 = vmatprep.subr.bf16.mxu0 0
        %453 = vmatpush1.bf16.msra.mxu0 0
        %454 = vmatprep.subr.bf16.mxu0 0
        %455 = vmatpush1.bf16.msra.mxu0 0
        %456 = vmatprep.subr.bf16.mxu0 0
        %457 = vmatpush1.bf16.msra.mxu0 0
        %458 = vmatprep.subr.bf16.mxu0 0
        %459 = vmatpush1.bf16.msra.mxu0 0
        %460 = vmatprep.subr.bf16.mxu0 0
        %461 = vmatpush1.bf16.msra.mxu0 0
        %462 = vmatprep.mubr.bf16.mxu0 0
        %463 = vmatmul.mubr.bf16.gmra.mrb[0].mxu0 %v425
        %v464 = vpop.f32.mrb[0].mxu0
        %v465 = vadd.f32 %v413, %v464
        %v466 = vpop.f32.mrb[0].mxu0
        %v467 = vpop.f32.mrb[0].mxu0
        %v468 = vadd.f32 %v416, %v467
        %v469 = vpop.f32.mrb[0].mxu0
        %470 = vdwg.mxu0
        %s471 = sadd.s32 %s26, 2
        %s472 = smul.u32 %s471, 2
        %s473 = smul.addr %s472, 4
        %s474 = scalar_lea.vmem %s191, %s473 [#allocation2]
        %v475 = vld [vmem:[%s474] sm:$0xf]
        %v476 = vld [vmem:[%s474] sm:$0xff]
        %v478 = vunpack.c.l.b16 %v476
        %v479 = vunpack.c.h.b16 %v476
        %v480 = vpack.c.b16 %v478, %v478
        %v481 = vpack.c.b16 %v479, %v479
        %482 = vrot.lane.b32.xlu0 %v480, 127
        %v483 = vpop.permute.xlu0 %482
        %484 = vrot.lane.b32.xlu0 %v481, 127
        %v485 = vpop.permute.xlu0 %484
        %v486 = vsel %vm233, %v483, %v485
        %487 = vrot.lane.b32.xlu0 %v480, 126
        %v488 = vpop.permute.xlu0 %487
        %489 = vrot.lane.b32.xlu0 %v481, 126
        %v490 = vpop.permute.xlu0 %489
        %v491 = vsel %vm239, %v488, %v490
        %492 = vrot.lane.b32.xlu0 %v480, 118
        %v493 = vpop.permute.xlu0 %492
        %494 = vrot.lane.b32.xlu0 %v481, 118
        %v495 = vpop.permute.xlu0 %494
        %v496 = vsel %vm245, %v493, %v495
        %497 = vrot.lane.b32.xlu0 %v480, 117
        %v498 = vpop.permute.xlu0 %497
        %499 = vrot.lane.b32.xlu0 %v481, 117
        %v500 = vpop.permute.xlu0 %499
        %v501 = vsel %vm251, %v498, %v500
        %502 = vrot.lane.b32.xlu0 %v480, 116
        %v503 = vpop.permute.xlu0 %502
        %504 = vrot.lane.b32.xlu0 %v481, 116
        %v505 = vpop.permute.xlu0 %504
        %v506 = vsel %vm257, %v503, %v505
        %507 = vrot.lane.b32.xlu0 %v480, 108
        %v508 = vpop.permute.xlu0 %507
        %509 = vrot.lane.b32.xlu0 %v481, 108
        %v510 = vpop.permute.xlu0 %509
        %v511 = vsel %vm263, %v508, %v510
        %512 = vrot.lane.b32.xlu0 %v480, 107
        %v513 = vpop.permute.xlu0 %512
        %514 = vrot.lane.b32.xlu0 %v481, 107
        %v515 = vpop.permute.xlu0 %514
        %v516 = vsel %vm269, %v513, %v515
        %517 = vrot.lane.b32.xlu0 %v480, 106
        %v518 = vpop.permute.xlu0 %517
        %519 = vrot.lane.b32.xlu0 %v481, 106
        %v520 = vpop.permute.xlu0 %519
        %v521 = vsel %vm275, %v518, %v520
        %v524 = vsel %vm277, %v475, %v486
        %v528 = vsel %vm277, %v491, %v496
        %v532 = vsel %vm277, %v501, %v506
        %v536 = vsel %vm277, %v511, %v516
        %s538 = scalar_lea.vmem [#allocation5], 16
        %v539 = vld [vmem:[%s538] sm:$0xf]
        %v540 = vld [vmem:[%s538 + $0x4] sm:$0xf]
        %v543 = vunpack.c.l.b16 %v539
        %v544 = vunpack.c.l.b16 %v540
        %v545 = vpack.c.b16 %v544, %v543
        %v547 = vsel %vm371, %v545, 0
        %v550 = vsel %vm277, %v521, 0
        %552 = vmatprep.subr.bf16.mxu0 0
        %553 = vmatpush1.bf16.msra.mxu0 %v524
        %554 = vmatprep.subr.bf16.mxu0 0
        %555 = vmatpush1.bf16.msra.mxu0 %v528
        %556 = vmatprep.subr.bf16.mxu0 0
        %557 = vmatpush1.bf16.msra.mxu0 %v532
        %558 = vmatprep.subr.bf16.mxu0 0
        %559 = vmatpush1.bf16.msra.mxu0 %v536
        %560 = vmatprep.subr.bf16.mxu0 0
        %561 = vmatpush1.bf16.msra.mxu0 %v550
        %562 = vmatprep.subr.bf16.mxu0 0
        %563 = vmatpush1.bf16.msra.mxu0 0
        %564 = vmatprep.subr.bf16.mxu0 0
        %565 = vmatpush1.bf16.msra.mxu0 0
        %566 = vmatprep.subr.bf16.mxu0 0
        %567 = vmatpush1.bf16.msra.mxu0 0
        %568 = vmatprep.subr.bf16.mxu0 0
        %569 = vmatpush1.bf16.msra.mxu0 0
        %570 = vmatprep.subr.bf16.mxu0 0
        %571 = vmatpush1.bf16.msra.mxu0 0
        %572 = vmatprep.subr.bf16.mxu0 0
        %573 = vmatpush1.bf16.msra.mxu0 0
        %574 = vmatprep.subr.bf16.mxu0 0
        %575 = vmatpush1.bf16.msra.mxu0 0
        %576 = vmatprep.subr.bf16.mxu0 0
        %577 = vmatpush1.bf16.msra.mxu0 0
        %578 = vmatprep.subr.bf16.mxu0 0
        %579 = vmatpush1.bf16.msra.mxu0 0
        %580 = vmatprep.subr.bf16.mxu0 0
        %581 = vmatpush1.bf16.msra.mxu0 0
        %582 = vmatprep.subr.bf16.mxu0 0
        %583 = vmatpush1.bf16.msra.mxu0 0
        %584 = vmatprep.mubr.bf16.mxu0 0
        %585 = vmatmul.mubr.bf16.gmra.mrb[0].mxu0 %v547
        %v586 = vpop.f32.mrb[0].mxu0
        %v587 = vadd.f32 0.0, %v586
        %v588 = vpop.f32.mrb[0].mxu0
        %v589 = vpop.f32.mrb[0].mxu0
        %v590 = vadd.f32 0.0, %v589
        %v591 = vpop.f32.mrb[0].mxu0
        %592 = vdwg.mxu0
        %v593 = vadd.f32 %v465, %v587
        %v594 = vadd.f32 %v468, %v590
        %v595 = vld [vmem:[%s2] sm:$0xff]
        %v596 = vld [vmem:[%s2 + $0x8] sm:$0xff]
        %598 = vset.pattern.permute.xlu0 0
        %599 = vperm.xlu0 %598, %v595
        %v600 = vpop.permute.xlu0 %599
        %603 = vset.pattern.permute.xlu0 0
        %604 = vperm.xlu0 %603, %v596
        %v605 = vpop.permute.xlu0 %604
        %v607 = vadd.f32 %v593, %v600
        %v608 = vadd.f32 %v594, %v605
        %vm609 = vcmp.ge.f32.partialorder %v607, 0.0
        %vm610 = vcmp.ge.f32.partialorder %v608, 0.0
        %v611 = vmul.f32 %v607, 0.25
        %v612 = vmul.f32 %v608, 0.25
        %v613 = vsel %vm609, %v607, %v611
        %v614 = vsel %vm610, %v608, %v612
        %615 = vst [vmem:[%s217] sm:$0xff] %v613
        %616 = vst [vmem:[%s217 + $0x8] sm:$0xff] %v614
        %s617 = sand.u32 %s111, 1
        %s618 = scalar_lea.sflag [#allocation4], %s617
        %s619 = sand.u32 %s111, 1
        %s620 = smul.addr %s619, 16
        %s621 = scalar_lea.vmem [#allocation7], %s620
        // Predicated region
        $region41: #{tpu_custom_call.1} parent=31 // pred_check
          %p622 = pneg %p121
        $region42: #{tpu_custom_call.1} parent=31 // pred_check_branch
          %624 = sbr.rel (%p622) target = $region44
        $region43: #{tpu_custom_call.1} parent=31 // pred_region
          %s626 = ssub.s32 256, 256
          %627 = vsyncadd %s618, %s626
          %s628 = smul.addr %s26, 2
          %s629 = smul.addr %s25, 4
          %s630 = sadd.s32 %s628, %s629
          %s631 = smul.addr %s630, 128
          %s632 = scalar_lea.hbm %s3, %s631
          %s633 = sshll.u32 %s621, 4
          %s634 = int_to_ptr.vmem [resolvable:$true] %s633
          %639 = dma.vmem_to_hbm [thread:$0]  %s634, 256, %s632, %s618, 128, 128, 8
        $region44: #{tpu_custom_call.1} parent=31 // pred_fallthru
          _
      $region32: #{tpu_custom_call.1} parent=5 // pred_fallthru
        _
      %p640 = scmp.le.s32.totalorder 2, %s16
      // Predicated region
      $region45: #{tpu_custom_call.1} parent=5 // pred_check
        %p641 = pneg %p640
      $region46: #{tpu_custom_call.1} parent=5 // pred_check_branch
        %643 = sbr.rel (%p641) target = $region48
      $region47: #{tpu_custom_call.1} parent=5 // pred_region
        %s644 = ssub.s32 %s16, 2
        // Predicated region
        $region49: #{tpu_custom_call.1} parent=47 // pred_check
          %p645 = pneg %p127
        $region50: #{tpu_custom_call.1} parent=47 // pred_check_branch
          %647 = sbr.rel (%p645) target = $region52
        $region51: #{tpu_custom_call.1} parent=47 // pred_region
          %s648 = sand.u32 %s112, 1
          %s649 = scalar_lea.sflag [#allocation4], %s648
          %s650 = sand.u32 %s112, 1
          %s651 = smul.addr %s650, 16
          %s652 = scalar_lea.vmem [#allocation7], %s651
          %653 = dma.done %s649, 256
        $region52: #{tpu_custom_call.1} parent=47 // pred_fallthru
          _
      $region48: #{tpu_custom_call.1} parent=5 // pred_fallthru
        _
    $region6: #{tpu_custom_call.1} parent=1 // loop_footer
      %s20 = sadd.s32 1, %s16
    $region7: #{tpu_custom_call.1} parent=1 // loop_footer_branch
      %15 = sbr.rel target = $region3
    $region8: #{tpu_custom_call.1} parent=1 // loop_exit
      _
    %654 = vsyncpa [#allocation3], 1
    %s655 = scalar_lea.sflag [#allocation3], 1
    %656 = vsyncpa %s655, 1
    %657 = vsyncpa [#allocation6], 1
    %658 = vsyncpa [#allocation4], 1
    %s659 = scalar_lea.sflag [#allocation4], 1
    %660 = vsyncpa %s659, 1

</llo_original>
